<compile_context>
chip_gen: v5e
topology: v5e:2x2
jax: 0.10.0
libtpu: 0.0.40
codegen_flags: <defaults>
</compile_context>

<pallas_src>
import functools

import jax
import jax.numpy as jnp
from jax import lax
from jax.experimental import pallas as pl
from jax.experimental.pallas import tpu as pltpu


def _round_up(x, m):
    return (x + m - 1) // m * m


def _pick_tile(dim, align, max_tile):
    """Largest tile (multiple of `align`, <= max_tile) that minimizes padding of `dim`.

    If the aligned dim fits in one tile, use a single tile covering it."""
    padded_min = _round_up(dim, align)
    if padded_min <= max_tile:
        return padded_min
    best_t = align
    best_pad = _round_up(dim, align) - dim
    for t in range(align, max_tile + 1, align):
        pad = _round_up(dim, t) - dim
        if pad < best_pad or (pad == best_pad and t > best_t):
            best_t, best_pad = t, pad
    return best_t


def _maybe_pad(a, pad_widths):
    if all(lo == 0 and hi == 0 for lo, hi in pad_widths):
        return a
    return jnp.pad(a, pad_widths)


@functools.lru_cache(maxsize=1)
def _vmem_limit_bytes():
    # ~3/4 of physical VMEM: ~96 MiB on v5e/v6e (128 MiB), ~48 MiB on v7x (64 MiB/TC).
    try:
        cap = pltpu.get_tpu_info().vmem_capacity_bytes
    except Exception:
        cap = 64 * 1024 * 1024  # conservative fallback (v7x-sized)
    return min(int(cap * 3 // 4), 100 * 1024 * 1024)


def _linear_kernel_inplace(x_ref, w_ref, b_ref, o_ref):
    # x_ref: (tm, tk)  w_ref: (tn, tk) (native [OUT, IN] layout)  b_ref: (1, tn)
    # o_ref: (tm, tn) float32 -- resident across the K grid axis, used as accumulator.
    @pl.when(pl.program_id(2) == 0)
    def _init():
        o_ref[...] = jnp.broadcast_to(b_ref[...], o_ref.shape)

    o_ref[...] += lax.dot_general(
        x_ref[...],
        w_ref[...],
        dimension_numbers=(((1,), (1,)), ((), ())),  # contract IN with IN (trans_b)
        preferred_element_type=jnp.float32,
    )


def _linear_kernel_scratch(x_ref, w_ref, b_ref, o_ref, acc_ref):
    # Used when the output dtype is not f32: accumulate in an f32 VMEM scratch.
    @pl.when(pl.program_id(2) == 0)
    def _init():
        acc_ref[...] = jnp.broadcast_to(
            b_ref[...].astype(jnp.float32), acc_ref.shape
        )

    acc_ref[...] += lax.dot_general(
        x_ref[...],
        w_ref[...],
        dimension_numbers=(((1,), (1,)), ((), ())),
        preferred_element_type=jnp.float32,
    )

    @pl.when(pl.program_id(2) == pl.num_programs(2) - 1)
    def _finalize():
        o_ref[...] = acc_ref[...].astype(o_ref.dtype)


@functools.partial(jax.jit, static_argnames=("max_tm", "max_tn", "max_tk"))
def my_linear(x, w, b, *, max_tm=1024, max_tn=512, max_tk=1024):
    """out[batch, OUT] = x[batch, IN] @ w[OUT, IN].T + b[OUT]  (MyLinear.forward)."""
    B, IN = x.shape
    OUT, IN2 = w.shape
    assert IN == IN2
    assert b.shape == (OUT,)

    out_dtype = x.dtype
    # Sublane alignment depends on dtype packing: 8 for f32, 16 for bf16, 32 for int8.
    sub_align = max(8, 32 // jnp.dtype(x.dtype).itemsize)

    tm = _pick_tile(B, sub_align, max_tm)
    tn = _pick_tile(OUT, 128, max_tn)
    tk = _pick_tile(IN, 128, max_tk)

    Bp = _round_up(B, tm)
    Np = _round_up(OUT, tn)
    Kp = _round_up(IN, tk)

    # v7x has 2 TensorCores sharing the "parallel" grid axes: make sure the
    # parallel cell count is >= 2 when we can split N without adding padding.
    if (Bp // tm) * (Np // tn) == 1 and tn > 128:
        for cand in range(tn - 128, 127, -128):
            if tn % cand == 0:
                tn = cand
                break

    xp = _maybe_pad(x, ((0, Bp - B), (0, Kp - IN)))
    wp = _maybe_pad(w, ((0, Np - OUT), (0, Kp - IN)))      # native [OUT, IN]
    bp = _maybe_pad(b, ((0, Np - OUT),)).reshape(1, Np)

    grid = (Bp // tm, Np // tn, Kp // tk)

    cost = pl.CostEstimate(
        flops=2 * Bp * Kp * Np,
        transcendentals=0,
        bytes_accessed=(
            Bp * Kp * x.dtype.itemsize
            + Np * Kp * w.dtype.itemsize
            + Np * b.dtype.itemsize
            + Bp * Np * jnp.dtype(out_dtype).itemsize
        ),
    )

    in_specs = [
        pl.BlockSpec((tm, tk), lambda i, j, k: (i, k)),    # x tile
        pl.BlockSpec((tn, tk), lambda i, j, k: (j, k)),    # w tile, native layout
        pl.BlockSpec((1, tn), lambda i, j, k: (0, j)),     # bias tile
    ]
    out_spec = pl.BlockSpec((tm, tn), lambda i, j, k: (i, j))

    acc_in_out = jnp.dtype(out_dtype) == jnp.float32
    kernel = _linear_kernel_inplace if acc_in_out else _linear_kernel_scratch
    scratch = [] if acc_in_out else [pltpu.VMEM((tm, tn), jnp.float32)]

    out_p = pl.pallas_call(
        kernel,
        out_shape=jax.ShapeDtypeStruct((Bp, Np), out_dtype),
        grid_spec=pltpu.PrefetchScalarGridSpec(
            num_scalar_prefetch=0,
            grid=grid,
            in_specs=in_specs,
            out_specs=out_spec,
            scratch_shapes=scratch,
        ),
        compiler_params=pltpu.CompilerParams(
            dimension_semantics=("parallel", "parallel", "arbitrary"),
            vmem_limit_bytes=_vmem_limit_bytes(),
        ),
        cost_estimate=cost,
    )(xp, wp, bp)

    if Bp == B and Np == OUT:
        return out_p
    return out_p[:B, :OUT]


if __name__ == "__main__":
    key = jax.random.PRNGKey(0)
    kx, kw, kb = jax.random.split(key, 3)

    # Small demo shapes consistent with MyLinear.forward (x @ w.T + b).
    batch, inp, outp = 8, 32, 16
    x = jax.random.normal(kx, (batch, inp), dtype=jnp.float32)
    w = jax.random.normal(kw, (outp, inp), dtype=jnp.float32)  # stands in for torch.randn
    b = jax.random.normal(kb, (outp,), dtype=jnp.float32)

    out = my_linear(x, w, b)
    jax.block_until_ready(out)
    ref = x @ w.T + b
    assert out.shape == (batch, outp)
    assert jnp.allclose(out, ref, atol=1e-5, rtol=1e-5)

    # Larger check: multi-tile N grid (OUT=384 -> tn picked with zero pad waste)
    # and forced multi-step K accumulation (max_tk=256 -> 2 K steps).
    k2x, k2w, k2b = jax.random.split(jax.random.PRNGKey(1), 3)
    B2, IN2, OUT2 = 512, 512, 384
    x2 = jax.random.normal(k2x, (B2, IN2), dtype=jnp.float32)
    w2 = jax.random.normal(k2w, (OUT2, IN2), dtype=jnp.float32)
    b2 = jax.random.normal(k2b, (OUT2,), dtype=jnp.float32)
    out2 = my_linear(x2, w2, b2, max_tk=256)
    jax.block_until_ready(out2)
    ref2 = jnp.dot(x2, w2.T, precision=lax.Precision.HIGHEST) + b2
    assert out2.shape == (B2, OUT2)
    assert jnp.allclose(out2, ref2, atol=2e-3, rtol=2e-3)

    # bf16 path exercises the scratch-accumulator kernel variant.
    xb = x.astype(jnp.bfloat16)
    wb = w.astype(jnp.bfloat16)
    bb = b.astype(jnp.bfloat16)
    out3 = my_linear(xb, wb, bb)
    jax.block_until_ready(out3)
    ref3 = (xb.astype(jnp.float32) @ wb.astype(jnp.float32).T
            + bb.astype(jnp.float32)).astype(jnp.bfloat16)
    assert out3.shape == (batch, outp)
    assert jnp.allclose(out3.astype(jnp.float32), ref3.astype(jnp.float32),
                        atol=5e-2, rtol=2e-2)

    print("KERNEL_OK")
</pallas_src>

<mosaic_0001>
module attributes {stable_mosaic.version = 11 : i64} {
  func.func @_linear_kernel_inplace(%arg0: i32, %arg1: i32, %arg2: i32, %arg3: memref<8x128xf32, #tpu.memory_space<vmem>>, %arg4: memref<128x128xf32, #tpu.memory_space<vmem>>, %arg5: memref<1x128xf32, #tpu.memory_space<vmem>>, %arg6: memref<8x128xf32, #tpu.memory_space<vmem>>) attributes {dimension_semantics = [#tpu.dimension_semantics<parallel>, #tpu.dimension_semantics<parallel>, #tpu.dimension_semantics<arbitrary>], iteration_bounds = array<i64: 1, 1, 1>, scalar_prefetch = 0 : i64, scratch_operands = 0 : i64, tpu.core_type = #tpu.core_type<tc>, window_params = [{transform_indices = @transform_0, window_bounds = array<i64: 8, 128>}, {transform_indices = @transform_1, window_bounds = array<i64: 128, 128>}, {transform_indices = @transform_2, window_bounds = array<i64: 1, 128>}, {transform_indices = @transform_3, window_bounds = array<i64: 8, 128>}]} {
    %c0_i32 = arith.constant 0 : i32
    %0 = arith.cmpi eq, %arg2, %c0_i32 : i32
    %1 = arith.extui %0 : i1 to i32
    %c0_i32_0 = arith.constant 0 : i32
    %2 = arith.cmpi ne, %1, %c0_i32_0 : i32
    scf.if %2 {
      %c0_8 = arith.constant 0 : index
      %c0_9 = arith.constant 0 : index
      %9 = vector.load %arg5[%c0_8, %c0_9] : memref<1x128xf32, #tpu.memory_space<vmem>>, vector<1x128xf32>
      %10 = vector.shape_cast %9 : vector<1x128xf32> to vector<1x128xf32>
      %11 = vector.broadcast %10 : vector<1x128xf32> to vector<8x128xf32>
      %c0_10 = arith.constant 0 : index
      %c0_11 = arith.constant 0 : index
      %12 = vector.load %arg6[%c0_10, %c0_11] : memref<8x128xf32, #tpu.memory_space<vmem>>, vector<8x128xf32>
      tpu.vector_store %arg6[%c0_10, %c0_11], %11 {strides = array<i32>} : memref<8x128xf32, #tpu.memory_space<vmem>>, vector<8x128xf32>,
    } else {
    }
    %c0 = arith.constant 0 : index
    %c0_1 = arith.constant 0 : index
    %3 = vector.load %arg6[%c0, %c0_1] : memref<8x128xf32, #tpu.memory_space<vmem>>, vector<8x128xf32>
    %c0_2 = arith.constant 0 : index
    %c0_3 = arith.constant 0 : index
    %4 = vector.load %arg3[%c0_2, %c0_3] : memref<8x128xf32, #tpu.memory_space<vmem>>, vector<8x128xf32>
    %c0_4 = arith.constant 0 : index
    %c0_5 = arith.constant 0 : index
    %5 = vector.load %arg4[%c0_4, %c0_5] : memref<128x128xf32, #tpu.memory_space<vmem>>, vector<128x128xf32>
    %cst = arith.constant dense<0.000000e+00> : vector<8x128xf32>
    %6 = tpu.matmul %4, %5, %cst {dimension_numbers = #tpu.dot_dimension_numbers<[1], [1], [0], [0], [0, 0, 1, 0], [], []>} : vector<8x128xf32>, vector<128x128xf32>, vector<8x128xf32> -> vector<8x128xf32>
    %7 = arith.addf %3, %6 : vector<8x128xf32>
    %c0_6 = arith.constant 0 : index
    %c0_7 = arith.constant 0 : index
    %8 = vector.load %arg6[%c0_6, %c0_7] : memref<8x128xf32, #tpu.memory_space<vmem>>, vector<8x128xf32>
    tpu.vector_store %arg6[%c0_6, %c0_7], %7 {strides = array<i32>} : memref<8x128xf32, #tpu.memory_space<vmem>>, vector<8x128xf32>,
    return
  }
  func.func @transform_0(%arg0: i32, %arg1: i32, %arg2: i32) -> (i32, i32) {
    %c0_i32 = arith.constant 0 : i32
    return %arg0, %arg2 : i32, i32
  }
  func.func @transform_1(%arg0: i32, %arg1: i32, %arg2: i32) -> (i32, i32) {
    %c0_i32 = arith.constant 0 : i32
    return %arg1, %arg2 : i32, i32
  }
  func.func @transform_2(%arg0: i32, %arg1: i32, %arg2: i32) -> (i32, i32) {
    %c0_i32 = arith.constant 0 : i32
    %c0_i32_0 = arith.constant 0 : i32
    return %c0_i32, %arg1 : i32, i32
  }
  func.func @transform_3(%arg0: i32, %arg1: i32, %arg2: i32) -> (i32, i32) {
    %c0_i32 = arith.constant 0 : i32
    return %arg0, %arg1 : i32, i32
  }
}

</mosaic_0001>

<llo_original>
// kernel: my_linear.1
$region0: #{my_linear.1}
  #allocation0 [shape = 'u32[]', space=smem, size = 0x4, offset = 0x4, fixed_abs, tag = 'smem constant byte address 0x4 - core index']
  #allocation1 [shape = 'u32[72,128]{1,0:T(1,128)}', space=vmem, size = 0x9000, scoped, tag = 'internal scratch']
  %s0 = inlined_call_operand.vmem [shape: f32[8,128], index: 0, kind: input, shape index: {}]
  %s1 = inlined_call_operand.vmem [shape: f32[128,128], index: 1, kind: input, shape index: {}]
  %s2 = inlined_call_operand.vmem [shape: f32[1,128], index: 2, kind: input, shape index: {}]
  %s3 = inlined_call_operand.hbm [shape: f32[8,128], index: 3, kind: output, shape index: {}]
  %s4 = sld [smem:[#allocation0]]
  $region26: #{my_linear.1} parent=0
    _
  %s6 = ssub.s32 1, %s4
  %s7 = scalar_select 0, %s6, %s4
  $region1: #{my_linear.1} parent=0
    #allocation2 [shape = 'u8[4096]{0}', space=vmem, size = 0x1000, scoped, tag = 'output window, operand 0, single buffered']
    #allocation3 [shape = 's32[1]{0}', space=sflag, size = 0x4, scoped, tag = 'scoped memory for my_linear.1']
    %8 = vsyncpa [#allocation3], 0
    // Predicated region
    $region2: #{my_linear.1} parent=1 // pred_check
      _
    $region3: #{my_linear.1} parent=1 // pred_check_branch
      %10 = sbr.rel (0) target = $region5
    $region4: #{my_linear.1} parent=1 // pred_region
      _
    $region5: #{my_linear.1} parent=1 // pred_fallthru
      _
    // Predicated region
    $region6: #{my_linear.1} parent=1 // pred_check
      _
    $region7: #{my_linear.1} parent=1 // pred_check_branch
      %12 = sbr.rel (0) target = $region9
    $region8: #{my_linear.1} parent=1 // pred_region
      _
    $region9: #{my_linear.1} parent=1 // pred_fallthru
      _
    // Predicated region
    $region10: #{my_linear.1} parent=1 // pred_check
      _
    $region11: #{my_linear.1} parent=1 // pred_check_branch
      %14 = sbr.rel (0) target = $region13
    $region12: #{my_linear.1} parent=1 // pred_region
      _
    $region13: #{my_linear.1} parent=1 // pred_fallthru
      _
    %p15 = scmp.eq.s32.totalorder 0, 0
    // Predicated region
    $region14: #{my_linear.1} parent=1 // pred_check
      %p16 = pneg %p15
    $region15: #{my_linear.1} parent=1 // pred_check_branch
      %18 = sbr.rel (%p16) target = $region17
    $region16: #{my_linear.1} parent=1 // pred_region
      %v19 = vld [vmem:[%s2] sm:$0x1]
      %v21 = vperm.slane %v19, 0
      %23 = vst [vmem:[#allocation2] sm:$0xff] %v21
    $region17: #{my_linear.1} parent=1 // pred_fallthru
      _
    %v24 = vld [vmem:[#allocation2] sm:$0xff]
    %v25 = vld [vmem:[%s0] sm:$0xff]
    %v26 = vld [vmem:[%s1] sm:$0xff]
    %v27 = vld [vmem:[%s1 + $0x8] sm:$0xff]
    %v28 = vld [vmem:[%s1 + $0x10] sm:$0xff]
    %v29 = vld [vmem:[%s1 + $0x18] sm:$0xff]
    %v30 = vld [vmem:[%s1 + $0x20] sm:$0xff]
    %v31 = vld [vmem:[%s1 + $0x28] sm:$0xff]
    %v32 = vld [vmem:[%s1 + $0x30] sm:$0xff]
    %v33 = vld [vmem:[%s1 + $0x38] sm:$0xff]
    %v34 = vld [vmem:[%s1 + $0x40] sm:$0xff]
    %v35 = vld [vmem:[%s1 + $0x48] sm:$0xff]
    %v36 = vld [vmem:[%s1 + $0x50] sm:$0xff]
    %v37 = vld [vmem:[%s1 + $0x58] sm:$0xff]
    %v38 = vld [vmem:[%s1 + $0x60] sm:$0xff]
    %v39 = vld [vmem:[%s1 + $0x68] sm:$0xff]
    %v40 = vld [vmem:[%s1 + $0x70] sm:$0xff]
    %v41 = vld [vmem:[%s1 + $0x78] sm:$0xff]
    %42 = vmatpush.xpose.msra.mxu0 %v41
    %43 = vmatpush.xpose.msra.mxu0 %v40
    %44 = vmatpush.xpose.msra.mxu0 %v39
    %45 = vmatpush.xpose.msra.mxu0 %v38
    %46 = vmatpush.xpose.msra.mxu0 %v37
    %47 = vmatpush.xpose.msra.mxu0 %v36
    %48 = vmatpush.xpose.msra.mxu0 %v35
    %49 = vmatpush.xpose.msra.mxu0 %v34
    %50 = vmatpush.xpose.msra.mxu0 %v33
    %51 = vmatpush.xpose.msra.mxu0 %v32
    %52 = vmatpush.xpose.msra.mxu0 %v31
    %53 = vmatpush.xpose.msra.mxu0 %v30
    %54 = vmatpush.xpose.msra.mxu0 %v29
    %55 = vmatpush.xpose.msra.mxu0 %v28
    %56 = vmatpush.xpose.msra.mxu0 %v27
    %57 = vmatpush.xpose.msra.mxu0 %v26
    %58 = vmatmul.f32.gmra.mxu0 %v25
    %v59 = vpop.f32.mrf.mxu0
    %v60 = vadd.f32 0.0, %v59
    %61 = vdwg.mxu0
    %v62 = vadd.f32 %v24, %v60
    %63 = vst [vmem:[#allocation2] sm:$0xff] %v62
    // Predicated region
    $region18: #{my_linear.1} parent=1 // pred_check
      _
    $region19: #{my_linear.1} parent=1 // pred_check_branch
      %65 = sbr.rel (0) target = $region21
    $region20: #{my_linear.1} parent=1 // pred_region
      %67 = vsyncadd [#allocation3], 0
      %s69 = sshll.u32 [#allocation2], 4
      %s70 = int_to_ptr.vmem [resolvable:$true] %s69
      %s71 = sshll.u32 %s3, 4
      %s72 = int_to_ptr.hbm [resolvable:$true] %s71
      %74 = dma.vmem_to_hbm [thread:$0]  %s70, 128, %s72, [#allocation3]
    $region21: #{my_linear.1} parent=1 // pred_fallthru
      _
    // Predicated region
    $region22: #{my_linear.1} parent=1 // pred_check
      _
    $region23: #{my_linear.1} parent=1 // pred_check_branch
      %76 = sbr.rel (0) target = $region25
    $region24: #{my_linear.1} parent=1 // pred_region
      %78 = dma.done [#allocation3], 128
    $region25: #{my_linear.1} parent=1 // pred_fallthru
      _
    %79 = vsyncpa [#allocation3], 1

</llo_original>
